<compile_context>
chip_gen: v7x
topology: tpu7x:2x2x1
jax: 0.10.0
libtpu: 0.0.40
codegen_flags: <defaults>
</compile_context>

<pallas_src>
import math

import jax
import jax.numpy as jnp
from jax.experimental import pallas as pl
from jax.experimental.pallas import tpu as pltpu


def _round_up(x, m):
    return (x + m - 1) // m * m


def _pick_tile(n_p, cap):
    """Largest multiple of 128 that divides n_p and is <= cap (n_p % 128 == 0)."""
    cap = max(128, min(cap, n_p))
    best = 128
    d = 128
    while d <= cap:
        if n_p % d == 0:
            best = d
        d += 128
    return best


# --------------------------------------------------------------------------
# Kernel: per-node transform  o = h @ wt (+ b)   (the small matmul)
# --------------------------------------------------------------------------
def _make_transform_kernel(add_bias):
    if add_bias:
        def kernel(h_ref, wt_ref, b_ref, o_ref):
            acc = jnp.dot(h_ref[...], wt_ref[...],
                          preferred_element_type=jnp.float32)
            o_ref[...] = (acc + b_ref[...]).astype(o_ref.dtype)
    else:
        def kernel(h_ref, wt_ref, o_ref):
            o_ref[...] = jnp.dot(h_ref[...], wt_ref[...],
                                 preferred_element_type=jnp.float32
                                 ).astype(o_ref.dtype)
    return kernel


# --------------------------------------------------------------------------
# Kernel: aggregation  out[dst] = sum_src A[dst, src] @ H[src]  (+ bias)
#   grid = (dst row blocks [parallel], src reduction blocks [arbitrary, last])
#   A and H are bf16 (single-pass MXU); accumulation is f32 directly into the
#   resident output block — no scratch accumulator, no per-step bias.
# --------------------------------------------------------------------------
def _make_agg_kernel(t_src, resident_h, add_bias):
    def body(adj_ref, h_ref, b_ref, out_ref):
        k = pl.program_id(1)

        @pl.when(k == 0)
        def _init():
            out_ref[...] = jnp.zeros_like(out_ref)

        if resident_h:
            start = pl.multiple_of(k * t_src, t_src)
            h = h_ref[pl.ds(start, t_src), :]
        else:
            h = h_ref[...]
        out_ref[...] += jnp.dot(adj_ref[...], h,
                                preferred_element_type=jnp.float32)

        if add_bias:
            @pl.when(k == pl.num_programs(1) - 1)
            def _epilogue():
                out_ref[...] += b_ref[...]

    if add_bias:
        def kernel(adj_ref, h_ref, b_ref, out_ref):
            body(adj_ref, h_ref, b_ref, out_ref)
    else:
        def kernel(adj_ref, h_ref, out_ref):
            body(adj_ref, h_ref, None, out_ref)
    return kernel


# --------------------------------------------------------------------------
# pallas_call wrappers
# --------------------------------------------------------------------------
def _transform(h, wt, bias, out_dtype, *, t_rows, vmem_limit):
    n_p, in_w = h.shape
    out_w = wt.shape[1]
    add_bias = bias is not None

    in_specs = [
        pl.BlockSpec((t_rows, in_w), lambda i: (i, 0)),
        pl.BlockSpec((in_w, out_w), lambda i: (0, 0)),
    ]
    args = [h, wt]
    bias_bytes = 0
    if add_bias:
        in_specs.append(pl.BlockSpec((1, out_w), lambda i: (0, 0)))
        args.append(bias)
        bias_bytes = 4 * out_w

    return pl.pallas_call(
        _make_transform_kernel(add_bias),
        out_shape=jax.ShapeDtypeStruct((n_p, out_w), out_dtype),
        grid=(n_p // t_rows,),
        in_specs=in_specs,
        out_specs=pl.BlockSpec((t_rows, out_w), lambda i: (i, 0)),
        compiler_params=pltpu.CompilerParams(
            dimension_semantics=("parallel",),
            vmem_limit_bytes=vmem_limit,
        ),
        cost_estimate=pl.CostEstimate(
            flops=2 * n_p * in_w * out_w,
            transcendentals=0,
            bytes_accessed=h.dtype.itemsize * n_p * in_w
            + wt.dtype.itemsize * in_w * out_w
            + jnp.dtype(out_dtype).itemsize * n_p * out_w
            + bias_bytes,
        ),
    )(*args)


def _aggregate(adj_p, h, bias, *, t_dst, t_src, vmem_limit, resident_budget):
    n_p = adj_p.shape[0]
    h_w = h.shape[1]
    add_bias = bias is not None
    n_dst_blocks = n_p // t_dst
    n_src_blocks = n_p // t_src

    # Keep H fully VMEM-resident across the whole reduction when it fits
    # (removes the (n_p/t_dst) x HBM re-stream of H); budget is conservative
    # (x2 for pipelining buffers) and capped for v7x's 64 MiB VMEM.
    resident_h = 2 * n_p * h_w * h.dtype.itemsize <= resident_budget
    if resident_h:
        h_spec = pl.BlockSpec((n_p, h_w), lambda i, k: (0, 0))
        h_bytes = n_p * h_w * h.dtype.itemsize
    else:
        h_spec = pl.BlockSpec((t_src, h_w), lambda i, k: (k, 0))
        h_bytes = n_dst_blocks * n_p * h_w * h.dtype.itemsize

    # Deeper buffering on the HBM-bound adjacency stream when the reduction is
    # long enough to benefit (per-step compute is short at narrow h_w).
    if n_src_blocks >= 3:
        adj_spec = pl.BlockSpec((t_dst, t_src), lambda i, k: (i, k),
                                pipeline_mode=pl.Buffered(3))
    else:
        adj_spec = pl.BlockSpec((t_dst, t_src), lambda i, k: (i, k))

    in_specs = [adj_spec, h_spec]
    args = [adj_p, h]
    bias_bytes = 0
    if add_bias:
        in_specs.append(pl.BlockSpec((1, h_w), lambda i, k: (0, 0)))
        args.append(bias)
        bias_bytes = 4 * h_w

    return pl.pallas_call(
        _make_agg_kernel(t_src, resident_h, add_bias),
        out_shape=jax.ShapeDtypeStruct((n_p, h_w), jnp.float32),
        grid=(n_dst_blocks, n_src_blocks),
        in_specs=in_specs,
        out_specs=pl.BlockSpec((t_dst, h_w), lambda i, k: (i, 0)),
        compiler_params=pltpu.CompilerParams(
            dimension_semantics=("parallel", "arbitrary"),
            vmem_limit_bytes=vmem_limit,
        ),
        cost_estimate=pl.CostEstimate(
            flops=2 * n_p * n_p * h_w,
            transcendentals=0,
            bytes_accessed=adj_p.dtype.itemsize * n_p * n_p
            + h_bytes + 4 * n_p * h_w + bias_bytes,
        ),
    )(*args)


# --------------------------------------------------------------------------
# Public API
# --------------------------------------------------------------------------
def prepare_adjacency(adj):
    """One-time (graph-build-time) prep of the dense aggregation matrix:
    cast to bf16 (integer edge multiplicities are exact in bf16 up to 256) and
    pad the (N, N) operand to 128-aligned size, OFF the per-layer hot path."""
    n = adj.shape[0]
    n_p = _round_up(n, 128)
    return jnp.pad(adj.astype(jnp.bfloat16), ((0, n_p - n), (0, n_p - n)))


def gcn_layer(adj, x, weight, bias, *, tile_dst=512, tile_src=2048):
    """GCNLayer forward:  out = A @ X @ W.T + b,
    A[dst, src] = #edges src->dst (DGL sum-of-src aggregation).

    `adj` may be the raw (N, N) f32 matrix or one already processed by
    `prepare_adjacency` (bf16, 128-padded) — pass the prepared one to keep the
    O(N^2) cast/pad off the hot path."""
    n, in_feats = x.shape
    out_feats = weight.shape[0]

    n_p = _round_up(n, 128)            # pad nodes only to 128, not to the tile
    in_p = _round_up(in_feats, 128)
    out_p = _round_up(out_feats, 128)  # lane-dense output -> unmasked stores

    if adj.dtype == jnp.bfloat16 and adj.shape == (n_p, n_p):
        adj_p = adj
    else:
        # Convenience slow path; prefer prepare_adjacency() at graph build time.
        adj_p = prepare_adjacency(adj)

    x_p = jnp.pad(x.astype(jnp.float32), ((0, n_p - n), (0, in_p - in_feats)))
    wt_p = jnp.pad(weight.T.astype(jnp.float32),
                   ((0, in_p - in_feats), (0, out_p - out_feats)))
    b_p = jnp.pad(bias.astype(jnp.float32), (0, out_p - out_feats)).reshape(1, out_p)

    # ---- tile selection -----------------------------------------------------
    # dst rows: <=512 and >=2 blocks when possible so both v7x TensorCores work.
    dst_cap = min(tile_dst, n_p // 2) if n_p >= 256 else n_p
    t_dst = _pick_tile(n_p, dst_cap)
    # src (reduction) axis: big tiles amortize the ~0.35us/step pipeline cost
    # and give the DMA engine large contiguous transfers of the adjacency.
    t_src = _pick_tile(n_p, tile_src)

    vmem_limit = 40 * 1024 * 1024        # fits v7x's 64 MiB physical VMEM
    resident_budget = 24 * 1024 * 1024   # v7x-safe cap for resident H

    # ---- ordering: run the N^2 matmul against the narrower *padded* operand --
    if out_p <= in_p:
        # out = A @ (X @ W.T) + b ; XW emitted in bf16 so the N^2 matmul is a
        # single-pass bf16 x bf16 MXU op (accumulation stays f32).
        xw = _transform(x_p, wt_p, None, jnp.bfloat16,
                        t_rows=t_dst, vmem_limit=vmem_limit)
        out_padded = _aggregate(adj_p, xw, b_p, t_dst=t_dst, t_src=t_src,
                                vmem_limit=vmem_limit,
                                resident_budget=resident_budget)
    else:
        # out = (A @ X) @ W.T + b ; X cast to bf16 once for the N^2 matmul, the
        # remaining (small) transform matmul runs in f32.
        ax = _aggregate(adj_p, x_p.astype(jnp.bfloat16), None,
                        t_dst=t_dst, t_src=t_src, vmem_limit=vmem_limit,
                        resident_budget=resident_budget)
        out_padded = _transform(ax, wt_p, b_p, jnp.float32,
                                t_rows=t_dst, vmem_limit=vmem_limit)

    return out_padded[:n, :out_feats]


# --------------------------------------------------------------------------
# Demo / self-test
# --------------------------------------------------------------------------
if __name__ == "__main__":
    key = jax.random.PRNGKey(0)
    k_graph, k_x1, k_w1, k_b1, k_x2, k_w2, k_b2 = jax.random.split(key, 7)

    N = 16  # number of graph nodes

    # Deterministic small graph: ring edges (every node gets >=1 incoming msg)
    # plus a few extra random edges.
    src_ring = jnp.arange(N)
    dst_ring = (src_ring + 1) % N
    extra_src = jax.random.randint(k_graph, (N,), 0, N)
    extra_dst = (extra_src + 3) % N
    src = jnp.concatenate([src_ring, extra_src])
    dst = jnp.concatenate([dst_ring, extra_dst])

    # Dense aggregation matrix A[dst, src] = number of edges src -> dst.
    # TODO(synk): the DGL sparse send/recv is realized here as a dense adjacency
    # matmul; a CSR gather/scatter Pallas kernel would be needed for huge sparse graphs.
    adj = jnp.zeros((N, N), dtype=jnp.float32).at[dst, src].add(1.0)
    adj_prepared = prepare_adjacency(adj)   # one-time, off the per-layer hot path

    def make_linear(kw, kb, in_feats, out_feats):
        bound = 1.0 / math.sqrt(in_feats)
        w = jax.random.uniform(kw, (out_feats, in_feats),
                               minval=-bound, maxval=bound, dtype=jnp.float32)
        b = jax.random.uniform(kb, (out_feats,),
                               minval=-bound, maxval=bound, dtype=jnp.float32)
        return w, b

    # --- config 1: exercises the A @ (X @ W.T) ordering -----------------------
    IN1, OUT1 = 32, 8
    x1 = jax.random.normal(k_x1, (N, IN1), dtype=jnp.float32)
    w1, b1 = make_linear(k_w1, k_b1, IN1, OUT1)
    out1 = jax.block_until_ready(gcn_layer(adj_prepared, x1, w1, b1))
    ref1 = (adj @ x1) @ w1.T + b1
    assert out1.shape == (N, OUT1)
    # bf16 operand on the N^2 matmul -> compare vs f32 reference at bf16-level tol.
    assert jnp.allclose(out1, ref1, atol=2e-2, rtol=2e-2), "config-1 mismatch"

    # --- config 2: out_p > in_p exercises the (A @ X) @ W.T ordering ----------
    IN2, OUT2 = 16, 192
    x2 = jax.random.normal(k_x2, (N, IN2), dtype=jnp.float32)
    w2, b2 = make_linear(k_w2, k_b2, IN2, OUT2)
    out2 = jax.block_until_ready(gcn_layer(adj_prepared, x2, w2, b2))
    ref2 = (adj @ x2) @ w2.T + b2
    assert out2.shape == (N, OUT2)
    assert jnp.allclose(out2, ref2, atol=2e-2, rtol=2e-2), "config-2 mismatch"

    print("KERNEL_OK")
</pallas_src>

<mosaic_0001>
module attributes {stable_mosaic.version = 11 : i64} {
  func.func @kernel(%arg0: i32, %arg1: memref<128x128xf32, #tpu.memory_space<vmem>>, %arg2: memref<128x128xf32, #tpu.memory_space<vmem>>, %arg3: memref<128x128xbf16, #tpu.memory_space<vmem>>) attributes {dimension_semantics = [#tpu.dimension_semantics<parallel>], iteration_bounds = array<i64: 1>, scalar_prefetch = 0 : i64, scratch_operands = 0 : i64, tpu.core_type = #tpu.core_type<tc>, window_params = [{transform_indices = @transform_0, window_bounds = array<i64: 128, 128>}, {pipeline_mode = #tpu.pipeline_mode<synchronous>, transform_indices = @transform_1, window_bounds = array<i64: 128, 128>}, {transform_indices = @transform_2, window_bounds = array<i64: 128, 128>}]} {
    %c0 = arith.constant 0 : index
    %c0_0 = arith.constant 0 : index
    %0 = vector.load %arg1[%c0, %c0_0] : memref<128x128xf32, #tpu.memory_space<vmem>>, vector<128x128xf32>
    %c0_1 = arith.constant 0 : index
    %c0_2 = arith.constant 0 : index
    %1 = vector.load %arg2[%c0_1, %c0_2] : memref<128x128xf32, #tpu.memory_space<vmem>>, vector<128x128xf32>
    %cst = arith.constant dense<0.000000e+00> : vector<128x128xf32>
    %2 = tpu.matmul %0, %1, %cst {dimension_numbers = #tpu.dot_dimension_numbers<[1], [0], [0], [1], [0, 0, 1, 1], [], []>} : vector<128x128xf32>, vector<128x128xf32>, vector<128x128xf32> -> vector<128x128xf32>
    %3 = arith.truncf %2 : vector<128x128xf32> to vector<128x128xbf16>
    %c0_3 = arith.constant 0 : index
    %c0_4 = arith.constant 0 : index
    %4 = vector.load %arg3[%c0_3, %c0_4] : memref<128x128xbf16, #tpu.memory_space<vmem>>, vector<128x128xbf16>
    tpu.vector_store %arg3[%c0_3, %c0_4], %3 {strides = array<i32>} : memref<128x128xbf16, #tpu.memory_space<vmem>>, vector<128x128xbf16>,
    return
  }
  func.func @transform_0(%arg0: i32) -> (i32, i32) {
    %c0_i32 = arith.constant 0 : i32
    %c0_i32_0 = arith.constant 0 : i32
    return %arg0, %c0_i32 : i32, i32
  }
  func.func @transform_1(%arg0: i32) -> (i32, i32) {
    %c0_i32 = arith.constant 0 : i32
    %c0_i32_0 = arith.constant 0 : i32
    %c0_i32_1 = arith.constant 0 : i32
    return %c0_i32, %c0_i32_0 : i32, i32
  }
  func.func @transform_2(%arg0: i32) -> (i32, i32) {
    %c0_i32 = arith.constant 0 : i32
    %c0_i32_0 = arith.constant 0 : i32
    return %arg0, %c0_i32 : i32, i32
  }
}

</mosaic_0001>

<llo_original>
// kernel: tpu_custom_call.1
$region0: #{tpu_custom_call.1}
  #allocation0 [shape = 'u32[]', space=smem, size = 0x4, offset = 0x4, fixed_abs, tag = 'smem constant byte address 0x4 - core index']
  #allocation1 [shape = 'u32[144,128]{1,0:T(1,128)}', space=vmem, size = 0x12000, scoped, tag = 'internal scratch']
  %s0 = inlined_call_operand.hbm [shape: f32[128,128], index: 0, kind: input, shape index: {}]
  %s1 = inlined_call_operand.hbm [shape: f32[128,128], index: 1, kind: input, shape index: {}]
  %s2 = inlined_call_operand.hbm [shape: bf16[128,128], index: 2, kind: output, shape index: {}]
  %s3 = sld [smem:[#allocation0]]
  $region26: #{tpu_custom_call.1} parent=0
    _
  %s5 = ssub.s32 1, %s3
  %s6 = scalar_select 0, %s5, %s3
  $region1: #{tpu_custom_call.1} parent=0
    #allocation2 [shape = 'u8[65536]{0}', space=vmem, size = 0x10000, scoped, tag = 'input window, operand 0, single buffered']
    #allocation3 [shape = 's32[1]{0}', space=sflag, size = 0x4, scoped, tag = 'scoped memory for tpu_custom_call.1']
    #allocation4 [shape = 's32[1]{0}', space=sflag, size = 0x4, scoped, tag = 'scoped memory for tpu_custom_call.1']
    #allocation5 [shape = 'u8[65536]{0}', space=vmem, size = 0x10000, scoped, tag = 'input window, operand 1, single buffered']
    #allocation6 [shape = 's32[1]{0}', space=sflag, size = 0x4, scoped, tag = 'scoped memory for tpu_custom_call.1']
    #allocation7 [shape = 'u8[32768]{0}', space=vmem, size = 0x8000, scoped, tag = 'output window, operand 0, single buffered']
    %7 = vsyncpa [#allocation3], 0
    %8 = vsyncpa [#allocation6], 0
    %9 = vsyncpa [#allocation4], 0
    // Predicated region
    $region2: #{tpu_custom_call.1} parent=1 // pred_check
      _
    $region3: #{tpu_custom_call.1} parent=1 // pred_check_branch
      %11 = sbr.rel (0) target = $region5
    $region4: #{tpu_custom_call.1} parent=1 // pred_region
      %s13 = ssub.s32 2048, 2048
      %14 = vsyncadd [#allocation3], %s13
      %s15 = sshll.u32 [#allocation2], 4
      %s16 = int_to_ptr.vmem [resolvable:$true] %s15
      %21 = dma.hbm_to_vmem [thread:$0]  %s0, 2048, %s16, [#allocation3], 128, 128, 8
    $region5: #{tpu_custom_call.1} parent=1 // pred_fallthru
      _
    // Predicated region
    $region6: #{tpu_custom_call.1} parent=1 // pred_check
      _
    $region7: #{tpu_custom_call.1} parent=1 // pred_check_branch
      %23 = sbr.rel (0) target = $region9
    $region8: #{tpu_custom_call.1} parent=1 // pred_region
      %s25 = ssub.s32 2048, 2048
      %26 = vsyncadd [#allocation6], %s25
      %s27 = sshll.u32 [#allocation5], 4
      %s28 = int_to_ptr.vmem [resolvable:$true] %s27
      %33 = dma.hbm_to_vmem [thread:$0]  %s1, 2048, %s28, [#allocation6], 128, 128, 8
    $region9: #{tpu_custom_call.1} parent=1 // pred_fallthru
      _
    // Predicated region
    $region10: #{tpu_custom_call.1} parent=1 // pred_check
      _
    $region11: #{tpu_custom_call.1} parent=1 // pred_check_branch
      %35 = sbr.rel (0) target = $region13
    $region12: #{tpu_custom_call.1} parent=1 // pred_region
      %36 = dma.done [#allocation3], 2048
    $region13: #{tpu_custom_call.1} parent=1 // pred_fallthru
      _
    // Predicated region
    $region14: #{tpu_custom_call.1} parent=1 // pred_check
      _
    $region15: #{tpu_custom_call.1} parent=1 // pred_check_branch
      %38 = sbr.rel (0) target = $region17
    $region16: #{tpu_custom_call.1} parent=1 // pred_region
      %39 = dma.done [#allocation6], 2048
    $region17: #{tpu_custom_call.1} parent=1 // pred_fallthru
      _
    %v40 = vld [vmem:[#allocation2] sm:$0xff]
    %v41 = vld [vmem:[#allocation2 + $0x8] sm:$0xff]
    %v42 = vld [vmem:[#allocation2 + $0x10] sm:$0xff]
    %v43 = vld [vmem:[#allocation2 + $0x18] sm:$0xff]
    %v44 = vld [vmem:[#allocation2 + $0x20] sm:$0xff]
    %v45 = vld [vmem:[#allocation2 + $0x28] sm:$0xff]
    %v46 = vld [vmem:[#allocation2 + $0x30] sm:$0xff]
    %v47 = vld [vmem:[#allocation2 + $0x38] sm:$0xff]
    %v48 = vld [vmem:[#allocation2 + $0x40] sm:$0xff]
    %v49 = vld [vmem:[#allocation2 + $0x48] sm:$0xff]
    %v50 = vld [vmem:[#allocation2 + $0x50] sm:$0xff]
    %v51 = vld [vmem:[#allocation2 + $0x58] sm:$0xff]
    %v52 = vld [vmem:[#allocation2 + $0x60] sm:$0xff]
    %v53 = vld [vmem:[#allocation2 + $0x68] sm:$0xff]
    %v54 = vld [vmem:[#allocation2 + $0x70] sm:$0xff]
    %v55 = vld [vmem:[#allocation2 + $0x78] sm:$0xff]
    %v56 = vld [vmem:[#allocation5] sm:$0xff]
    %v57 = vld [vmem:[#allocation5 + $0x8] sm:$0xff]
    %v58 = vld [vmem:[#allocation5 + $0x10] sm:$0xff]
    %v59 = vld [vmem:[#allocation5 + $0x18] sm:$0xff]
    %v60 = vld [vmem:[#allocation5 + $0x20] sm:$0xff]
    %v61 = vld [vmem:[#allocation5 + $0x28] sm:$0xff]
    %v62 = vld [vmem:[#allocation5 + $0x30] sm:$0xff]
    %v63 = vld [vmem:[#allocation5 + $0x38] sm:$0xff]
    %v64 = vld [vmem:[#allocation5 + $0x40] sm:$0xff]
    %v65 = vld [vmem:[#allocation5 + $0x48] sm:$0xff]
    %v66 = vld [vmem:[#allocation5 + $0x50] sm:$0xff]
    %v67 = vld [vmem:[#allocation5 + $0x58] sm:$0xff]
    %v68 = vld [vmem:[#allocation5 + $0x60] sm:$0xff]
    %v69 = vld [vmem:[#allocation5 + $0x68] sm:$0xff]
    %v70 = vld [vmem:[#allocation5 + $0x70] sm:$0xff]
    %v71 = vld [vmem:[#allocation5 + $0x78] sm:$0xff]
    %72 = vmatprep.subr.mxu0 0.0
    %73 = vmatpush1.msra.mxu0 %v56
    %74 = vmatprep.subr.mxu0 0.0
    %75 = vmatpush1.msra.mxu0 %v57
    %76 = vmatprep.subr.mxu0 0.0
    %77 = vmatpush1.msra.mxu0 %v58
    %78 = vmatprep.subr.mxu0 0.0
    %79 = vmatpush1.msra.mxu0 %v59
    %80 = vmatprep.subr.mxu0 0.0
    %81 = vmatpush1.msra.mxu0 %v60
    %82 = vmatprep.subr.mxu0 0.0
    %83 = vmatpush1.msra.mxu0 %v61
    %84 = vmatprep.subr.mxu0 0.0
    %85 = vmatpush1.msra.mxu0 %v62
    %86 = vmatprep.subr.mxu0 0.0
    %87 = vmatpush1.msra.mxu0 %v63
    %88 = vmatprep.subr.mxu0 0.0
    %89 = vmatpush1.msra.mxu0 %v64
    %90 = vmatprep.subr.mxu0 0.0
    %91 = vmatpush1.msra.mxu0 %v65
    %92 = vmatprep.subr.mxu0 0.0
    %93 = vmatpush1.msra.mxu0 %v66
    %94 = vmatprep.subr.mxu0 0.0
    %95 = vmatpush1.msra.mxu0 %v67
    %96 = vmatprep.subr.mxu0 0.0
    %97 = vmatpush1.msra.mxu0 %v68
    %98 = vmatprep.subr.mxu0 0.0
    %99 = vmatpush1.msra.mxu0 %v69
    %100 = vmatprep.subr.mxu0 0.0
    %101 = vmatpush1.msra.mxu0 %v70
    %102 = vmatprep.subr.mxu0 0.0
    %103 = vmatpush1.msra.mxu0 %v71
    %104 = vmatprep.subr.mxu0 0.0
    %105 = vmatpush1.msra.mxu0 0.0
    %106 = vmatprep.subr.mxu0 0.0
    %107 = vmatpush1.msra.mxu0 0.0
    %108 = vmatprep.subr.mxu0 0.0
    %109 = vmatpush1.msra.mxu0 0.0
    %110 = vmatprep.subr.mxu0 0.0
    %111 = vmatpush1.msra.mxu0 0.0
    %112 = vmatprep.subr.mxu0 0.0
    %113 = vmatpush1.msra.mxu0 0.0
    %114 = vmatprep.subr.mxu0 0.0
    %115 = vmatpush1.msra.mxu0 0.0
    %116 = vmatprep.subr.mxu0 0.0
    %117 = vmatpush1.msra.mxu0 0.0
    %118 = vmatprep.subr.mxu0 0.0
    %119 = vmatpush1.msra.mxu0 0.0
    %120 = vmatprep.subr.mxu0 0.0
    %121 = vmatpush1.msra.mxu0 0.0
    %122 = vmatprep.subr.mxu0 0.0
    %123 = vmatpush1.msra.mxu0 0.0
    %124 = vmatprep.subr.mxu0 0.0
    %125 = vmatpush1.msra.mxu0 0.0
    %126 = vmatprep.subr.mxu0 0.0
    %127 = vmatpush1.msra.mxu0 0.0
    %128 = vmatprep.subr.mxu0 0.0
    %129 = vmatpush1.msra.mxu0 0.0
    %130 = vmatprep.subr.mxu0 0.0
    %131 = vmatpush1.msra.mxu0 0.0
    %132 = vmatprep.subr.mxu0 0.0
    %133 = vmatpush1.msra.mxu0 0.0
    %134 = vmatprep.subr.mxu0 0.0
    %135 = vmatpush1.msra.mxu0 0.0
    %136 = vmatprep.mubr.f32.mxu0 0.0
    %137 = vmatmul.mubr.f32.gmra.mrb[0].mxu0 %v40
    %v138 = vpop.f32.mrb[0].mxu0
    %v139 = vadd.f32 0.0, %v138
    %v140 = vpop.f32.mrb[0].mxu0
    %141 = vmatprep.mubr.f32.mxu0 0.0
    %142 = vmatmul.mubr.f32.gmra.mrb[0].mxu0 %v41
    %v143 = vpop.f32.mrb[0].mxu0
    %v144 = vadd.f32 0.0, %v143
    %v145 = vpop.f32.mrb[0].mxu0
    %146 = vmatprep.mubr.f32.mxu0 0.0
    %147 = vmatmul.mubr.f32.gmra.mrb[0].mxu0 %v42
    %v148 = vpop.f32.mrb[0].mxu0
    %v149 = vadd.f32 0.0, %v148
    %v150 = vpop.f32.mrb[0].mxu0
    %151 = vmatprep.mubr.f32.mxu0 0.0
    %152 = vmatmul.mubr.f32.gmra.mrb[0].mxu0 %v43
    %v153 = vpop.f32.mrb[0].mxu0
    %v154 = vadd.f32 0.0, %v153
    %v155 = vpop.f32.mrb[0].mxu0
    %156 = vmatprep.mubr.f32.mxu0 0.0
    %157 = vmatmul.mubr.f32.gmra.mrb[0].mxu0 %v44
    %v158 = vpop.f32.mrb[0].mxu0
    %v159 = vadd.f32 0.0, %v158
    %v160 = vpop.f32.mrb[0].mxu0
    %161 = vmatprep.mubr.f32.mxu0 0.0
    %162 = vmatmul.mubr.f32.gmra.mrb[0].mxu0 %v45
    %v163 = vpop.f32.mrb[0].mxu0
    %v164 = vadd.f32 0.0, %v163
    %v165 = vpop.f32.mrb[0].mxu0
    %166 = vmatprep.mubr.f32.mxu0 0.0
    %167 = vmatmul.mubr.f32.gmra.mrb[0].mxu0 %v46
    %v168 = vpop.f32.mrb[0].mxu0
    %v169 = vadd.f32 0.0, %v168
    %v170 = vpop.f32.mrb[0].mxu0
    %171 = vmatprep.mubr.f32.mxu0 0.0
    %172 = vmatmul.mubr.f32.gmra.mrb[0].mxu0 %v47
    %v173 = vpop.f32.mrb[0].mxu0
    %v174 = vadd.f32 0.0, %v173
    %v175 = vpop.f32.mrb[0].mxu0
    %176 = vmatprep.mubr.f32.mxu0 0.0
    %177 = vmatmul.mubr.f32.gmra.mrb[0].mxu0 %v48
    %v178 = vpop.f32.mrb[0].mxu0
    %v179 = vadd.f32 0.0, %v178
    %v180 = vpop.f32.mrb[0].mxu0
    %181 = vmatprep.mubr.f32.mxu0 0.0
    %182 = vmatmul.mubr.f32.gmra.mrb[0].mxu0 %v49
    %v183 = vpop.f32.mrb[0].mxu0
    %v184 = vadd.f32 0.0, %v183
    %v185 = vpop.f32.mrb[0].mxu0
    %186 = vmatprep.mubr.f32.mxu0 0.0
    %187 = vmatmul.mubr.f32.gmra.mrb[0].mxu0 %v50
    %v188 = vpop.f32.mrb[0].mxu0
    %v189 = vadd.f32 0.0, %v188
    %v190 = vpop.f32.mrb[0].mxu0
    %191 = vmatprep.mubr.f32.mxu0 0.0
    %192 = vmatmul.mubr.f32.gmra.mrb[0].mxu0 %v51
    %v193 = vpop.f32.mrb[0].mxu0
    %v194 = vadd.f32 0.0, %v193
    %v195 = vpop.f32.mrb[0].mxu0
    %196 = vmatprep.mubr.f32.mxu0 0.0
    %197 = vmatmul.mubr.f32.gmra.mrb[0].mxu0 %v52
    %v198 = vpop.f32.mrb[0].mxu0
    %v199 = vadd.f32 0.0, %v198
    %v200 = vpop.f32.mrb[0].mxu0
    %201 = vmatprep.mubr.f32.mxu0 0.0
    %202 = vmatmul.mubr.f32.gmra.mrb[0].mxu0 %v53
    %v203 = vpop.f32.mrb[0].mxu0
    %v204 = vadd.f32 0.0, %v203
    %v205 = vpop.f32.mrb[0].mxu0
    %206 = vmatprep.mubr.f32.mxu0 0.0
    %207 = vmatmul.mubr.f32.gmra.mrb[0].mxu0 %v54
    %v208 = vpop.f32.mrb[0].mxu0
    %v209 = vadd.f32 0.0, %v208
    %v210 = vpop.f32.mrb[0].mxu0
    %211 = vmatprep.mubr.f32.mxu0 0.0
    %212 = vmatmul.mubr.f32.gmra.mrb[0].mxu0 %v55
    %v213 = vpop.f32.mrb[0].mxu0
    %v214 = vadd.f32 0.0, %v213
    %v215 = vpop.f32.mrb[0].mxu0
    %216 = vdwg.mxu0
    %v217 = vpack.c.bf16 %v144, %v139
    %v218 = vpack.c.bf16 %v154, %v149
    %v219 = vpack.c.bf16 %v164, %v159
    %v220 = vpack.c.bf16 %v174, %v169
    %v221 = vpack.c.bf16 %v184, %v179
    %v222 = vpack.c.bf16 %v194, %v189
    %v223 = vpack.c.bf16 %v204, %v199
    %v224 = vpack.c.bf16 %v214, %v209
    %v233 = vunpack.c.l.b16 %v217
    %v234 = vunpack.c.h.b16 %v217
    %v235 = vunpack.c.l.b16 %v218
    %v236 = vunpack.c.h.b16 %v218
    %v237 = vunpack.c.l.b16 %v219
    %v238 = vunpack.c.h.b16 %v219
    %v239 = vunpack.c.l.b16 %v220
    %v240 = vunpack.c.h.b16 %v220
    %v241 = vunpack.c.l.b16 %v221
    %v242 = vunpack.c.h.b16 %v221
    %v243 = vunpack.c.l.b16 %v222
    %v244 = vunpack.c.h.b16 %v222
    %v245 = vunpack.c.l.b16 %v223
    %v246 = vunpack.c.h.b16 %v223
    %v247 = vunpack.c.l.b16 %v224
    %v248 = vunpack.c.h.b16 %v224
    %v249 = vpack.c.b16 %v233, %v233
    %v250 = vpack.c.b16 %v234, %v234
    %v251 = vpack.c.b16 %v235, %v235
    %v252 = vpack.c.b16 %v236, %v236
    %v253 = vpack.c.b16 %v237, %v237
    %v254 = vpack.c.b16 %v238, %v238
    %v255 = vpack.c.b16 %v239, %v239
    %v256 = vpack.c.b16 %v240, %v240
    %v257 = vpack.c.b16 %v241, %v241
    %v258 = vpack.c.b16 %v242, %v242
    %v259 = vpack.c.b16 %v243, %v243
    %v260 = vpack.c.b16 %v244, %v244
    %v261 = vpack.c.b16 %v245, %v245
    %v262 = vpack.c.b16 %v246, %v246
    %v263 = vpack.c.b16 %v247, %v247
    %v264 = vpack.c.b16 %v248, %v248
    %281 = vst [vmem:[#allocation7] sm:$0xf] %v249
    %282 = vst [vmem:[#allocation7 + $0x4] sm:$0xf] %v250
    %283 = vst [vmem:[#allocation7 + $0x8] sm:$0xf] %v251
    %284 = vst [vmem:[#allocation7 + $0xc] sm:$0xf] %v252
    %285 = vst [vmem:[#allocation7 + $0x10] sm:$0xf] %v253
    %286 = vst [vmem:[#allocation7 + $0x14] sm:$0xf] %v254
    %287 = vst [vmem:[#allocation7 + $0x18] sm:$0xf] %v255
    %288 = vst [vmem:[#allocation7 + $0x1c] sm:$0xf] %v256
    %289 = vst [vmem:[#allocation7 + $0x20] sm:$0xf] %v257
    %290 = vst [vmem:[#allocation7 + $0x24] sm:$0xf] %v258
    %291 = vst [vmem:[#allocation7 + $0x28] sm:$0xf] %v259
    %292 = vst [vmem:[#allocation7 + $0x2c] sm:$0xf] %v260
    %293 = vst [vmem:[#allocation7 + $0x30] sm:$0xf] %v261
    %294 = vst [vmem:[#allocation7 + $0x34] sm:$0xf] %v262
    %295 = vst [vmem:[#allocation7 + $0x38] sm:$0xf] %v263
    %296 = vst [vmem:[#allocation7 + $0x3c] sm:$0xf] %v264
    // Predicated region
    $region18: #{tpu_custom_call.1} parent=1 // pred_check
      _
    $region19: #{tpu_custom_call.1} parent=1 // pred_check_branch
      %298 = sbr.rel (0) target = $region21
    $region20: #{tpu_custom_call.1} parent=1 // pred_region
      %s300 = ssub.s32 1024, 1024
      %301 = vsyncadd [#allocation4], %s300
      %s302 = sshll.u32 [#allocation7], 4
      %s303 = int_to_ptr.vmem [resolvable:$true] %s302
      %308 = dma.vmem_to_hbm [thread:$0]  %s303, 1024, %s2, [#allocation4], 64, 64, 4
    $region21: #{tpu_custom_call.1} parent=1 // pred_fallthru
      _
    // Predicated region
    $region22: #{tpu_custom_call.1} parent=1 // pred_check
      _
    $region23: #{tpu_custom_call.1} parent=1 // pred_check_branch
      %310 = sbr.rel (0) target = $region25
    $region24: #{tpu_custom_call.1} parent=1 // pred_region
      %311 = dma.done [#allocation4], 1024
    $region25: #{tpu_custom_call.1} parent=1 // pred_fallthru
      _
    %312 = vsyncpa [#allocation3], 1
    %313 = vsyncpa [#allocation6], 1
    %314 = vsyncpa [#allocation4], 1

</llo_original>
